<compile_context>
chip_gen: v6e
topology: v6e:2x2x1
jax: 0.10.0
libtpu: 0.0.40
codegen_flags: <defaults>
</compile_context>

<pallas_src>
import functools

import jax
import jax.numpy as jnp
from jax import lax
from jax.experimental import pallas as pl
from jax.experimental.pallas import tpu as pltpu


def _initial_block_kernel(x_ref, w_ref, shift_ref, out_ref, *, cin, cout, wo):
    # x_ref    : (6, Cin, L)   tap slots for one row tile, L = toh*Wo.
    #            slot kh     (cs=0): padded[2o+kh, 2j+2]  -> conv tap (kh, kw=2)
    #            slot 3 + kh (cs=1): padded[2o+kh, 2j+1]  -> conv tap (kh, kw=1)
    # w_ref    : (Cout, 9*Cin) conv weights (BN scale folded), (kh, kw, c) order
    # shift_ref: (Cout, 1)     folded BN shift (f32)
    # out_ref  : (Cout+Cin, L) one row tile of the lane-flat NCHW output
    L = x_ref.shape[-1]
    # Lanes that are output column 0 of some row (need the zero left-pad value
    # for the kw=0 tap).  Computed once per tile.
    col0 = lax.broadcasted_iota(jnp.int32, (1, L), 1) % wo == 0

    taps = []
    for kh in range(3):
        cs0 = x_ref[kh]          # (Cin, L): tap (kh, kw=2)
        cs1 = x_ref[3 + kh]      # (Cin, L): tap (kh, kw=1)
        # tap (kh, kw=0) = padded[2o+kh, 2j] = cs0 shifted right by one output
        # column, with output col 0 taking the (zero) left-pad value.
        # roll is XLU work (has slack), mask is one VPU select per kh per tile.
        kw0 = jnp.where(col0, jnp.zeros_like(cs0),
                        pltpu.roll(cs0, shift=1, axis=1))
        taps += [kw0, cs1, cs0]  # (kh, kw=0..2) order -> matches weight layout

    patch = jnp.concatenate(taps, axis=0)                       # (9*Cin, L)
    # One MXU matmul per tile, f32 accumulation; shift added once per tile.
    conv = jnp.dot(w_ref[...], patch,
                   preferred_element_type=jnp.float32) + shift_ref[...]
    # 2x2/s2 maxpool taps == conv taps with (kh, kw) in {1,2} x {1,2}.
    pool = jnp.maximum(jnp.maximum(taps[4], taps[5]),
                       jnp.maximum(taps[7], taps[8]))            # (Cin, L)
    # relu(concat(main, side)) == concat(relu(main), relu(side)); dense stores.
    out_ref[:cout, :] = jnp.maximum(conv, 0.0).astype(out_ref.dtype)
    out_ref[cout:, :] = jnp.maximum(pool, 0.0).astype(out_ref.dtype)


def _pick_row_tile(ho, wo, cin, cout, in_itemsize, budget_bytes):
    """Largest divisor of Ho whose double-buffered in+out blocks fit the budget.

    The flat lane width toh*Wo must be a multiple of 128 (unmasked stores and
    valid blocking) or equal the full Ho*Wo.
    """
    def pad8(c):
        return -(-c // 8) * 8

    def blk_bytes(toh):
        lane = toh * wo
        return 2 * lane * (6 * pad8(cin) * in_itemsize + pad8(cout + cin) * 4)

    cands = [t for t in range(1, ho + 1)
             if ho % t == 0 and ((t * wo) % 128 == 0 or t == ho)]
    fits = [t for t in cands if blk_bytes(t) <= budget_bytes]
    return max(fits) if fits else min(cands)


def initial_block_mp(x_nchw, conv_w, gamma, beta, run_mean, run_var,
                     eps=1e-5, input_dtype=jnp.float32,
                     vmem_block_budget=16 * 1024 * 1024):
    """Forward of InitialBlockMP. x_nchw: (N, Cin, H, W). Returns NCHW f32."""
    n, cin, h, w = x_nchw.shape
    cout = conv_w.shape[0]
    assert h % 2 == 0 and w % 2 == 0, "even spatial dims required for concat"
    ho, wo = h // 2, w // 2
    toh = _pick_row_tile(ho, wo, cin, cout,
                         jnp.dtype(input_dtype).itemsize, vmem_block_budget)
    lane = toh * wo

    # --- host prep: cast first (halves bytes when bf16), pad, split into the
    #     6 lane-flat tap slots.  slot = col_parity*3 + kh. ---
    xp = jnp.pad(x_nchw.astype(input_dtype), ((0, 0), (0, 0), (1, 1), (1, 1)))
    cs0 = xp[:, :, :, 2::2]       # padded cols 2,4,...,W    (taps kw=2 / kw=0)
    cs1 = xp[:, :, :, 1:-1:2]     # padded cols 1,3,...,W-1  (tap  kw=1)
    slots = [cs[:, :, kh:kh + 2 * ho:2, :]       # padded rows kh, kh+2, ...
             for cs in (cs0, cs1) for kh in range(3)]
    xbands = jnp.stack(slots, axis=1).reshape(n, 6, cin, ho * wo)

    # --- conv weights as (Cout, 9*Cin), BN scale folded in ---
    inv = gamma / jnp.sqrt(run_var + eps)                               # (Cout,)
    w_mat = jnp.transpose(conv_w, (0, 2, 3, 1)).reshape(cout, 9 * cin)
    w_scaled = (w_mat * inv[:, None]).astype(input_dtype)
    shift = (beta - run_mean * inv).reshape(cout, 1).astype(jnp.float32)

    kernel = functools.partial(_initial_block_kernel, cin=cin, cout=cout, wo=wo)

    out_flat = pl.pallas_call(
        kernel,
        out_shape=jax.ShapeDtypeStruct((n, cout + cin, ho * wo), jnp.float32),
        grid_spec=pltpu.PrefetchScalarGridSpec(
            num_scalar_prefetch=0,
            grid=(n, ho // toh),
            in_specs=[
                # Per-tile input band (no whole-image VMEM residency); the
                # pipeline double-buffers this DMA.
                pl.BlockSpec((None, 6, cin, lane), lambda b, r: (b, 0, 0, r)),
                pl.BlockSpec((cout, 9 * cin), lambda b, r: (0, 0)),
                pl.BlockSpec((cout, 1), lambda b, r: (0, 0)),
            ],
            out_specs=pl.BlockSpec((None, cout + cin, lane),
                                   lambda b, r: (b, 0, r)),
        ),
        compiler_params=pltpu.CompilerParams(
            dimension_semantics=("parallel", "parallel"),
            vmem_limit_bytes=64 * 1024 * 1024),
    )(xbands, w_scaled, shift)

    # Lane-flat -> NCHW (metadata-only reshape).
    return out_flat.reshape(n, cout + cin, ho, wo)


def _reference(x_nchw, conv_w, gamma, beta, run_mean, run_var, eps=1e-5):
    main = lax.conv_general_dilated(
        x_nchw, conv_w, window_strides=(2, 2), padding=((1, 1), (1, 1)),
        dimension_numbers=("NCHW", "OIHW", "NCHW"))
    inv = 1.0 / jnp.sqrt(run_var + eps)
    main = (main - run_mean[None, :, None, None]) * (gamma * inv)[None, :, None, None] \
        + beta[None, :, None, None]
    side = lax.reduce_window(x_nchw, -jnp.inf, lax.max,
                             (1, 1, 2, 2), (1, 1, 2, 2), "VALID")
    return jnp.maximum(jnp.concatenate([main, side], axis=1), 0.0)


if __name__ == "__main__":
    key = jax.random.PRNGKey(0)
    k_x, k_w, k_g, k_b, k_m, k_v = jax.random.split(key, 6)

    N, CIN, H, W = 2, 4, 16, 16
    COUT = 13

    x = jax.random.normal(k_x, (N, CIN, H, W), dtype=jnp.float32)
    conv_w = jax.random.normal(k_w, (COUT, CIN, 3, 3), dtype=jnp.float32) * 0.1
    gamma = 1.0 + 0.1 * jax.random.normal(k_g, (COUT,), dtype=jnp.float32)
    beta = 0.1 * jax.random.normal(k_b, (COUT,), dtype=jnp.float32)
    run_mean = 0.1 * jax.random.normal(k_m, (COUT,), dtype=jnp.float32)
    run_var = jnp.abs(jax.random.normal(k_v, (COUT,), dtype=jnp.float32)) + 0.5

    out = initial_block_mp(x, conv_w, gamma, beta, run_mean, run_var)
    out = jax.block_until_ready(out)

    ref = _reference(x, conv_w, gamma, beta, run_mean, run_var)
    assert out.shape == (N, COUT + CIN, H // 2, W // 2), out.shape
    assert jnp.allclose(out, ref, atol=1e-4, rtol=1e-4), \
        float(jnp.max(jnp.abs(out - ref)))

    print("KERNEL_OK")
</pallas_src>

<mosaic_0001>
module attributes {stable_mosaic.version = 11 : i64} {
  func.func @_initial_block_kernel(%arg0: i32, %arg1: i32, %arg2: memref<1x6x4x64xf32, #tpu.memory_space<vmem>>, %arg3: memref<13x36xf32, #tpu.memory_space<vmem>>, %arg4: memref<13x1xf32, #tpu.memory_space<vmem>>, %arg5: memref<1x17x64xf32, #tpu.memory_space<vmem>>) attributes {dimension_semantics = [#tpu.dimension_semantics<parallel>, #tpu.dimension_semantics<parallel>], iteration_bounds = array<i64: 2, 1>, scalar_prefetch = 0 : i64, scratch_operands = 0 : i64, tpu.core_type = #tpu.core_type<tc>, window_params = [{transform_indices = @transform_0, window_bounds = array<i64: 1, 6, 4, 64>}, {pipeline_mode = #tpu.pipeline_mode<synchronous>, transform_indices = @transform_1, window_bounds = array<i64: 13, 36>}, {pipeline_mode = #tpu.pipeline_mode<synchronous>, transform_indices = @transform_2, window_bounds = array<i64: 13, 1>}, {transform_indices = @transform_3, window_bounds = array<i64: 1, 17, 64>}]} {
    %0 = tpu.iota {dimensions = array<i32: 1>} : vector<1x64xi32>
    %c8_i32 = arith.constant 8 : i32
    %c0_i32 = arith.constant 0 : i32
    %1 = arith.cmpi eq, %c8_i32, %c0_i32 : i32
    %c1_i32 = arith.constant 1 : i32
    %2 = arith.select %1, %c1_i32, %c8_i32 : i32
    %3 = vector.broadcast %2 : i32 to vector<1x64xi32>
    %4 = arith.remsi %0, %3 : vector<1x64xi32>
    %c0_i32_0 = arith.constant 0 : i32
    %5 = vector.broadcast %c0_i32_0 : i32 to vector<1x64xi32>
    %6 = arith.cmpi ne, %4, %5 : vector<1x64xi32>
    %c0_i32_1 = arith.constant 0 : i32
    %7 = vector.broadcast %c0_i32_1 : i32 to vector<1x64xi32>
    %8 = arith.cmpi slt, %4, %7 : vector<1x64xi32>
    %c0_i32_2 = arith.constant 0 : i32
    %9 = arith.cmpi slt, %2, %c0_i32_2 : i32
    %10 = vector.broadcast %9 : i1 to vector<1x64xi1>
    %11 = vector.broadcast %10 : vector<1x64xi1> to vector<1x64xi1>
    %12 = arith.xori %8, %11 : vector<1x64xi1>
    %13 = arith.andi %12, %6 : vector<1x64xi1>
    %14 = vector.broadcast %2 : i32 to vector<1x64xi32>
    %15 = arith.addi %4, %14 : vector<1x64xi32>
    %16 = arith.select %13, %15, %4 : vector<1x64xi1>, vector<1x64xi32>
    %c0_i32_3 = arith.constant 0 : i32
    %17 = vector.broadcast %c0_i32_3 : i32 to vector<1x64xi32>
    %18 = arith.cmpi eq, %16, %17 : vector<1x64xi32>
    %c0 = arith.constant 0 : index
    %c0_4 = arith.constant 0 : index
    %c0_5 = arith.constant 0 : index
    %c0_6 = arith.constant 0 : index
    %19 = vector.load %arg2[%c0, %c0_4, %c0_5, %c0_6] : memref<1x6x4x64xf32, #tpu.memory_space<vmem>>, vector<1x1x4x64xf32>
    %20 = vector.shape_cast %19 : vector<1x1x4x64xf32> to vector<4x64xf32>
    %c0_7 = arith.constant 0 : index
    %c3 = arith.constant 3 : index
    %c0_8 = arith.constant 0 : index
    %c0_9 = arith.constant 0 : index
    %21 = vector.load %arg2[%c0_7, %c3, %c0_8, %c0_9] : memref<1x6x4x64xf32, #tpu.memory_space<vmem>>, vector<1x1x4x64xf32>
    %22 = vector.shape_cast %21 : vector<1x1x4x64xf32> to vector<4x64xf32>
    %cst = arith.constant 0.000000e+00 : f32
    %23 = vector.broadcast %cst : f32 to vector<4x64xf32>
    %c1_i32_10 = arith.constant 1 : i32
    %24 = tpu.dynamic_rotate %20 by %c1_i32_10 dim 1 : vector<4x64xf32>, i32 -> vector<4x64xf32>
    %25 = vector.shape_cast %18 : vector<1x64xi1> to vector<1x64xi1>
    %26 = vector.broadcast %25 : vector<1x64xi1> to vector<4x64xi1>
    %27 = arith.select %26, %23, %24 : vector<4x64xi1>, vector<4x64xf32>
    %c0_11 = arith.constant 0 : index
    %c1 = arith.constant 1 : index
    %c0_12 = arith.constant 0 : index
    %c0_13 = arith.constant 0 : index
    %28 = vector.load %arg2[%c0_11, %c1, %c0_12, %c0_13] : memref<1x6x4x64xf32, #tpu.memory_space<vmem>>, vector<1x1x4x64xf32>
    %29 = vector.shape_cast %28 : vector<1x1x4x64xf32> to vector<4x64xf32>
    %c0_14 = arith.constant 0 : index
    %c4 = arith.constant 4 : index
    %c0_15 = arith.constant 0 : index
    %c0_16 = arith.constant 0 : index
    %30 = vector.load %arg2[%c0_14, %c4, %c0_15, %c0_16] : memref<1x6x4x64xf32, #tpu.memory_space<vmem>>, vector<1x1x4x64xf32>
    %31 = vector.shape_cast %30 : vector<1x1x4x64xf32> to vector<4x64xf32>
    %cst_17 = arith.constant 0.000000e+00 : f32
    %32 = vector.broadcast %cst_17 : f32 to vector<4x64xf32>
    %c1_i32_18 = arith.constant 1 : i32
    %33 = tpu.dynamic_rotate %29 by %c1_i32_18 dim 1 : vector<4x64xf32>, i32 -> vector<4x64xf32>
    %34 = vector.shape_cast %18 : vector<1x64xi1> to vector<1x64xi1>
    %35 = vector.broadcast %34 : vector<1x64xi1> to vector<4x64xi1>
    %36 = arith.select %35, %32, %33 : vector<4x64xi1>, vector<4x64xf32>
    %c0_19 = arith.constant 0 : index
    %c2 = arith.constant 2 : index
    %c0_20 = arith.constant 0 : index
    %c0_21 = arith.constant 0 : index
    %37 = vector.load %arg2[%c0_19, %c2, %c0_20, %c0_21] : memref<1x6x4x64xf32, #tpu.memory_space<vmem>>, vector<1x1x4x64xf32>
    %38 = vector.shape_cast %37 : vector<1x1x4x64xf32> to vector<4x64xf32>
    %c0_22 = arith.constant 0 : index
    %c5 = arith.constant 5 : index
    %c0_23 = arith.constant 0 : index
    %c0_24 = arith.constant 0 : index
    %39 = vector.load %arg2[%c0_22, %c5, %c0_23, %c0_24] : memref<1x6x4x64xf32, #tpu.memory_space<vmem>>, vector<1x1x4x64xf32>
    %40 = vector.shape_cast %39 : vector<1x1x4x64xf32> to vector<4x64xf32>
    %cst_25 = arith.constant 0.000000e+00 : f32
    %41 = vector.broadcast %cst_25 : f32 to vector<4x64xf32>
    %c1_i32_26 = arith.constant 1 : i32
    %42 = tpu.dynamic_rotate %38 by %c1_i32_26 dim 1 : vector<4x64xf32>, i32 -> vector<4x64xf32>
    %43 = vector.shape_cast %18 : vector<1x64xi1> to vector<1x64xi1>
    %44 = vector.broadcast %43 : vector<1x64xi1> to vector<4x64xi1>
    %45 = arith.select %44, %41, %42 : vector<4x64xi1>, vector<4x64xf32>
    %46 = tpu.concatenate %27, %22, %20, %36, %31, %29, %45, %40, %38 in 0 : vector<4x64xf32>, vector<4x64xf32>, vector<4x64xf32>, vector<4x64xf32>, vector<4x64xf32>, vector<4x64xf32>, vector<4x64xf32>, vector<4x64xf32>, vector<4x64xf32> -> vector<36x64xf32>
    %c0_27 = arith.constant 0 : index
    %c0_28 = arith.constant 0 : index
    %47 = vector.load %arg3[%c0_27, %c0_28] : memref<13x36xf32, #tpu.memory_space<vmem>>, vector<13x36xf32>
    %cst_29 = arith.constant dense<0.000000e+00> : vector<13x64xf32>
    %48 = tpu.matmul %47, %46, %cst_29 {dimension_numbers = #tpu.dot_dimension_numbers<[1], [0], [0], [1], [0, 0, 1, 1], [], []>} : vector<13x36xf32>, vector<36x64xf32>, vector<13x64xf32> -> vector<13x64xf32>
    %c0_30 = arith.constant 0 : index
    %c0_31 = arith.constant 0 : index
    %49 = vector.load %arg4[%c0_30, %c0_31] : memref<13x1xf32, #tpu.memory_space<vmem>>, vector<13x1xf32>
    %50 = vector.broadcast %49 : vector<13x1xf32> to vector<13x64xf32>
    %51 = arith.addf %48, %50 : vector<13x64xf32>
    %52 = arith.maximumf %31, %29 : vector<4x64xf32>
    %53 = arith.maximumf %40, %38 : vector<4x64xf32>
    %54 = arith.maximumf %52, %53 : vector<4x64xf32>
    %cst_32 = arith.constant 0.000000e+00 : f32
    %55 = vector.broadcast %cst_32 : f32 to vector<13x64xf32>
    %56 = arith.maximumf %51, %55 : vector<13x64xf32>
    %c0_33 = arith.constant 0 : index
    %c0_34 = arith.constant 0 : index
    %c0_35 = arith.constant 0 : index
    %57 = vector.load %arg5[%c0_33, %c0_34, %c0_35] : memref<1x17x64xf32, #tpu.memory_space<vmem>>, vector<1x13x64xf32>
    %58 = vector.shape_cast %57 : vector<1x13x64xf32> to vector<13x64xf32>
    %59 = vector.shape_cast %56 : vector<13x64xf32> to vector<1x13x64xf32>
    tpu.vector_store %arg5[%c0_33, %c0_34, %c0_35], %59 {strides = array<i32>} : memref<1x17x64xf32, #tpu.memory_space<vmem>>, vector<1x13x64xf32>,
    %cst_36 = arith.constant 0.000000e+00 : f32
    %60 = vector.broadcast %cst_36 : f32 to vector<4x64xf32>
    %61 = arith.maximumf %54, %60 : vector<4x64xf32>
    %c0_37 = arith.constant 0 : index
    %c13 = arith.constant 13 : index
    %c0_38 = arith.constant 0 : index
    %62 = vector.load %arg5[%c0_37, %c13, %c0_38] : memref<1x17x64xf32, #tpu.memory_space<vmem>>, vector<1x4x64xf32>
    %63 = vector.shape_cast %62 : vector<1x4x64xf32> to vector<4x64xf32>
    %64 = vector.shape_cast %61 : vector<4x64xf32> to vector<1x4x64xf32>
    tpu.vector_store %arg5[%c0_37, %c13, %c0_38], %64 {strides = array<i32>} : memref<1x17x64xf32, #tpu.memory_space<vmem>>, vector<1x4x64xf32>,
    return
  }
  func.func @transform_0(%arg0: i32, %arg1: i32) -> (i32, i32, i32, i32) {
    %c0_i32 = arith.constant 0 : i32
    %c0_i32_0 = arith.constant 0 : i32
    %c0_i32_1 = arith.constant 0 : i32
    return %arg0, %c0_i32, %c0_i32_0, %arg1 : i32, i32, i32, i32
  }
  func.func @transform_1(%arg0: i32, %arg1: i32) -> (i32, i32) {
    %c0_i32 = arith.constant 0 : i32
    %c0_i32_0 = arith.constant 0 : i32
    %c0_i32_1 = arith.constant 0 : i32
    return %c0_i32, %c0_i32_0 : i32, i32
  }
  func.func @transform_2(%arg0: i32, %arg1: i32) -> (i32, i32) {
    %c0_i32 = arith.constant 0 : i32
    %c0_i32_0 = arith.constant 0 : i32
    %c0_i32_1 = arith.constant 0 : i32
    return %c0_i32, %c0_i32_0 : i32, i32
  }
  func.func @transform_3(%arg0: i32, %arg1: i32) -> (i32, i32, i32) {
    %c0_i32 = arith.constant 0 : i32
    %c0_i32_0 = arith.constant 0 : i32
    return %arg0, %c0_i32, %arg1 : i32, i32, i32
  }
}

</mosaic_0001>

<llo_original>
// kernel: tpu_custom_call.1
$region0: #{tpu_custom_call.1}
  #allocation0 [shape = 'u32[]', space=smem, size = 0x4, offset = 0x4, fixed_abs, tag = 'smem constant byte address 0x4 - core index']
  #allocation1 [shape = 'u32[144,128]{1,0:T(1,128)}', space=vmem, size = 0x12000, scoped, tag = 'internal scratch']
  %s0 = inlined_call_operand.hbm [shape: f32[2,6,4,64], index: 0, kind: input, shape index: {}]
  %s1 = inlined_call_operand.vmem [shape: f32[13,36], index: 1, kind: input, shape index: {}]
  %s2 = inlined_call_operand.vmem [shape: f32[13,1], index: 2, kind: input, shape index: {}]
  %s3 = inlined_call_operand.vmem [shape: f32[2,17,64], index: 3, kind: output, shape index: {}]
  %s4 = sld [smem:[#allocation0]]
  $region49: #{tpu_custom_call.1} parent=0
    _
  %s6 = ssub.s32 1, %s4
  %s7 = scalar_select 0, %s6, %s4
  $region1: #{tpu_custom_call.1} parent=0
    #allocation2 [shape = 'u8[24576]{0}', space=vmem, size = 0x6000, scoped, tag = 'input window, operand 0']
    #allocation3 [shape = 's32[2]{0}', space=sflag, size = 0x8, scoped, tag = 'scoped memory for tpu_custom_call.1']
    %8 = vsyncpa [#allocation3], 0
    %s9 = scalar_lea.sflag [#allocation3], 1
    %10 = vsyncpa %s9, 0
    loop: start=0, step=1, limit=4
    $region2: #{tpu_custom_call.1} parent=1 // loop_pre_header
      _
    $region3: #{tpu_custom_call.1} parent=1 // loop_header
      %s12 = sphi 0, %s16
      %p13 = scmp.ge.s32.totalorder %s12, 4
      %s19 = sphi 0, %s31
      %s20 = sphi 0, %s27
      %s21 = sphi 0, %s19
      %s22 = sphi 0, %s20
      %s23 = sphi 0, %s21
      %s24 = sphi 0, %s22
      %s36 = sphi 0, %s38
      %s39 = sphi 0, %s36
      %s40 = sphi 0, %s39
      %s56 = sphi 0, %s40
      %s60 = sphi 0, %s60
      %s62 = sphi 0, %s60
      %s63 = sphi 0, %s62
      %s77 = sphi 0, %s63
      %s81 = sphi 0, %s81
      %s83 = sphi 0, %s81
      %s84 = sphi 0, %s83
      %s98 = sphi 0, %s84
      %s106 = sphi 0, %s108
      %s109 = sphi 0, %s106
      %s110 = sphi 0, %s109
      %s126 = sphi 0, %s110
    $region4: #{tpu_custom_call.1} parent=1 // loop_header_branch
      %15 = sbr.rel (%p13) target = $region8
    $region5: #{tpu_custom_call.1} parent=1 // loop_body
      %s17 = ssub.s32 %s12, 1
      %s18 = ssub.s32 %s12, 2
      %s25 = sadd.s32 1, %s20
      %p26 = scmp.ge.s32.totalorder %s25, 1
      %s27 = scalar_select %p26, 0, %s25
      %s28 = sadd.s32 1, %s19
      %s29 = scalar_select %p26, %s28, %s19
      %p30 = scmp.ge.s32.totalorder %s29, 2
      %s31 = scalar_select %p30, 0, %s29
      %s32 = ssub.s32 %s19, %s31
      %s33 = ssub.s32 %s20, %s27
      %s34 = sor.u32 %s32, %s33
      %p35 = scmp.eq.s32.totalorder %s34, 0
      %s37 = sadd.s32 %s36, 1
      %s38 = scalar_select %p35, %s36, %s37
      %p41 = pneg %p35
      %p42 = scmp.eq.s32.totalorder %s12, 1
      %p43 = por %p41, %p42
      %p44 = scmp.ne.s32.totalorder %s36, %s39
      %p45 = scmp.eq.s32.totalorder %s12, 0
      %p46 = por %p44, %p45
      %p47 = scmp.ne.s32.totalorder %s36, %s39
      %p48 = scmp.eq.s32.totalorder %s17, 1
      %p49 = por %p47, %p48
      %p50 = scmp.ne.s32.totalorder %s39, %s40
      %p51 = scmp.eq.s32.totalorder %s17, 0
      %p52 = por %p50, %p51
      %p53 = scmp.ne.s32.totalorder %s39, %s40
      %p54 = scmp.eq.s32.totalorder %s18, 1
      %p55 = por %p53, %p54
      %p57 = scmp.ne.s32.totalorder %s40, %s56
      %p58 = scmp.eq.s32.totalorder %s18, 0
      %p59 = por %p57, %p58
      %s61 = sadd.s32 %s60, 1
      %p64 = scmp.eq.s32.totalorder %s12, 1
      %p65 = scmp.ne.s32.totalorder %s60, %s62
      %p66 = scmp.eq.s32.totalorder %s12, 0
      %p67 = por %p65, %p66
      %p68 = scmp.ne.s32.totalorder %s60, %s62
      %p69 = scmp.eq.s32.totalorder %s17, 1
      %p70 = por %p68, %p69
      %p71 = scmp.ne.s32.totalorder %s62, %s63
      %p72 = scmp.eq.s32.totalorder %s17, 0
      %p73 = por %p71, %p72
      %p74 = scmp.ne.s32.totalorder %s62, %s63
      %p75 = scmp.eq.s32.totalorder %s18, 1
      %p76 = por %p74, %p75
      %p78 = scmp.ne.s32.totalorder %s63, %s77
      %p79 = scmp.eq.s32.totalorder %s18, 0
      %p80 = por %p78, %p79
      %s82 = sadd.s32 %s81, 1
      %p85 = scmp.eq.s32.totalorder %s12, 1
      %p86 = scmp.ne.s32.totalorder %s81, %s83
      %p87 = scmp.eq.s32.totalorder %s12, 0
      %p88 = por %p86, %p87
      %p89 = scmp.ne.s32.totalorder %s81, %s83
      %p90 = scmp.eq.s32.totalorder %s17, 1
      %p91 = por %p89, %p90
      %p92 = scmp.ne.s32.totalorder %s83, %s84
      %p93 = scmp.eq.s32.totalorder %s17, 0
      %p94 = por %p92, %p93
      %p95 = scmp.ne.s32.totalorder %s83, %s84
      %p96 = scmp.eq.s32.totalorder %s18, 1
      %p97 = por %p95, %p96
      %p99 = scmp.ne.s32.totalorder %s84, %s98
      %p100 = scmp.eq.s32.totalorder %s18, 0
      %p101 = por %p99, %p100
      %s102 = ssub.s32 %s19, %s31
      %s103 = ssub.s32 %s20, %s27
      %s104 = sor.u32 %s102, %s103
      %p105 = scmp.eq.s32.totalorder %s104, 0
      %s107 = sadd.s32 %s106, 1
      %s108 = scalar_select %p105, %s106, %s107
      %p111 = pneg %p105
      %p112 = scmp.eq.s32.totalorder %s12, 1
      %p113 = por %p111, %p112
      %p114 = scmp.ne.s32.totalorder %s106, %s109
      %p115 = scmp.eq.s32.totalorder %s12, 0
      %p116 = por %p114, %p115
      %p117 = scmp.ne.s32.totalorder %s106, %s109
      %p118 = scmp.eq.s32.totalorder %s17, 1
      %p119 = por %p117, %p118
      %p120 = scmp.ne.s32.totalorder %s109, %s110
      %p121 = scmp.eq.s32.totalorder %s17, 0
      %p122 = por %p120, %p121
      %p123 = scmp.ne.s32.totalorder %s109, %s110
      %p124 = scmp.eq.s32.totalorder %s18, 1
      %p125 = por %p123, %p124
      %p127 = scmp.ne.s32.totalorder %s110, %s126
      %p128 = scmp.eq.s32.totalorder %s18, 0
      %p129 = por %p127, %p128
      %p130 = scmp.le.s32.totalorder 1, %s12
      %p131 = scmp.lt.s32.totalorder %s12, 3
      %p132 = pnand %p130, %p131
      %p133 = pneg %p132
      // Predicated region
      $region9: #{tpu_custom_call.1} parent=5 // pred_check
        _
      $region10: #{tpu_custom_call.1} parent=5 // pred_check_branch
        %135 = sbr.rel (%p132) target = $region12
      $region11: #{tpu_custom_call.1} parent=5 // pred_region
        %s136 = ssub.s32 %s12, 1
        // Predicated region
        $region13: #{tpu_custom_call.1} parent=11 // pred_check
          %p137 = pneg %p73
        $region14: #{tpu_custom_call.1} parent=11 // pred_check_branch
          %139 = sbr.rel (%p137) target = $region16
        $region15: #{tpu_custom_call.1} parent=11 // pred_region
          _
        $region16: #{tpu_custom_call.1} parent=11 // pred_fallthru
          _
        // Predicated region
        $region17: #{tpu_custom_call.1} parent=11 // pred_check
          %p140 = pneg %p94
        $region18: #{tpu_custom_call.1} parent=11 // pred_check_branch
          %142 = sbr.rel (%p140) target = $region20
        $region19: #{tpu_custom_call.1} parent=11 // pred_region
          _
        $region20: #{tpu_custom_call.1} parent=11 // pred_fallthru
          _
      $region12: #{tpu_custom_call.1} parent=5 // pred_fallthru
        _
      %p143 = scmp.lt.s32.totalorder %s12, 2
      // Predicated region
      $region21: #{tpu_custom_call.1} parent=5 // pred_check
        %p144 = pneg %p143
      $region22: #{tpu_custom_call.1} parent=5 // pred_check_branch
        %146 = sbr.rel (%p144) target = $region24
      $region23: #{tpu_custom_call.1} parent=5 // pred_region
        // Predicated region
        $region25: #{tpu_custom_call.1} parent=23 // pred_check
          %p147 = pneg %p46
        $region26: #{tpu_custom_call.1} parent=23 // pred_check_branch
          %149 = sbr.rel (%p147) target = $region28
        $region27: #{tpu_custom_call.1} parent=23 // pred_region
          %s150 = sand.u32 %s36, 1
          %s151 = scalar_lea.sflag [#allocation3], %s150
          %s152 = sand.u32 %s36, 1
          %s153 = smul.addr %s152, 24
          %s154 = scalar_lea.vmem [#allocation2], %s153
          %s156 = ssub.s32 384, 384
          %157 = vsyncadd %s151, %s156
          %s158 = smul.addr %s19, 6
          %s159 = sadd.s32 %s20, %s158
          %s160 = smul.addr %s159, 64
          %s161 = scalar_lea.hbm %s0, %s160
          %s162 = sshll.u32 %s154, 4
          %s163 = int_to_ptr.vmem [resolvable:$true] %s162
          %168 = dma.hbm_to_vmem [thread:$0]  %s161, 384, %s163, %s151, 64, 64, 4
        $region28: #{tpu_custom_call.1} parent=23 // pred_fallthru
          _
      $region24: #{tpu_custom_call.1} parent=5 // pred_fallthru
        _
      %p169 = scmp.le.s32.totalorder 1, %s12
      %p170 = scmp.lt.s32.totalorder %s12, 3
      %p171 = pnand %p169, %p170
      %p172 = pneg %p171
      // Predicated region
      $region29: #{tpu_custom_call.1} parent=5 // pred_check
        _
      $region30: #{tpu_custom_call.1} parent=5 // pred_check_branch
        %174 = sbr.rel (%p171) target = $region32
      $region31: #{tpu_custom_call.1} parent=5 // pred_region
        %s175 = ssub.s32 %s12, 1
        %s176 = sand.u32 %s39, 1
        %s177 = scalar_lea.sflag [#allocation3], %s176
        %s178 = sand.u32 %s39, 1
        %s179 = smul.addr %s178, 24
        %s180 = scalar_lea.vmem [#allocation2], %s179
        // Predicated region
        $region33: #{tpu_custom_call.1} parent=31 // pred_check
          %p181 = pneg %p52
        $region34: #{tpu_custom_call.1} parent=31 // pred_check_branch
          %183 = sbr.rel (%p181) target = $region36
        $region35: #{tpu_custom_call.1} parent=31 // pred_region
          %184 = dma.done %s177, 384
        $region36: #{tpu_custom_call.1} parent=31 // pred_fallthru
          _
        %s185 = sand.u32 %s39, 1
        %s186 = scalar_lea.sflag [#allocation3], %s185
        %s187 = sand.u32 %s39, 1
        %s188 = smul.addr %s187, 24
        %s189 = scalar_lea.vmem [#allocation2], %s188
        %p190 = pneg %p52
        %p191 = pneg %p49
        %p192 = pneg %p73
        %p193 = pneg %p70
        %p194 = pneg %p94
        %p195 = pneg %p91
        %p196 = pneg %p122
        %p197 = pneg %p119
        %p198 = scmp.lt.s32.totalorder %s21, 1
        %s199 = scalar_select %p198, %s21, 1
        %p200 = scmp.lt.s32.totalorder %s22, 0
        %s201 = scalar_select %p200, %s22, 0
        %s202 = smul.addr %s199, 3
        %s203 = sadd.s32 %s201, %s202
        %s204 = smul.addr %s203, 8
        %s205 = scalar_lea.vmem %s3, %s204
        %p206 = scmp.lt.s32.totalorder %s21, 1
        %s207 = scalar_select %p206, %s21, 1
        %p208 = scmp.lt.s32.totalorder %s22, 0
        %s209 = scalar_select %p208, %s22, 0
        %s210 = smul.addr %s207, 3
        %s211 = sadd.s32 %s209, %s210
        %s212 = smul.addr %s211, 8
        %s213 = scalar_lea.vmem %s3, %s212
        %v214 = vlaneseq
        %v215 = vand.u32 %v214, 127
        %vm216 = vcmp.lt.s32.totalorder %v215, 0
        %v217 = vsub.s32 0, %v215
        %v218 = vsel %vm216, %v217, %v215
        %v219 = vshrl.u32 %v218, 3
        %v220 = vand.u32 %v218, 7
        %v221 = vsub.s32 0, %v220
        %v222 = vsel %vm216, %v221, %v220
        %vm223 = vcmp.ne.s32.totalorder %v222, 0
        %vm224 = vcmp.lt.s32.totalorder %v222, 0
        %vm225 = vmand %vm224, %vm223
        %v226 = vadd.s32 %v222, 8
        %v227 = vsel %vm225, %v226, %v222
        %vm228 = vcmp.eq.s32.totalorder %v227, 0
        %v229 = vld [vmem:[%s180] sm:$0xf]
        %s230 = scalar_lea.vmem %s180, 12 [#allocation2]
        %v231 = vld [vmem:[%s230] sm:$0xf]
        %vm232 = vcmask 1048064
        %233 = vrot.lane.b32.xlu0 %v229, 64
        %v234 = vpop.permute.xlu0 %233
        %v235 = vsel %vm232, %v234, %v229
        %236 = vrot.lane.b32.xlu0 %v235, 64
        %v237 = vpop.permute.xlu0 %236
        %v238 = vsel %vm232, %v237, %v229
        %v239 = vsel %vm228, 1, 0
        %vm240 = vcmp.eq.s32.totalorder %v239, 1
        %242 = vrot.lane.b32.xlu0 %v238, 65
        %v243 = vpop.permute.xlu0 %242
        %v245 = vsel %vm240, 0.0, %v243
        %s246 = scalar_lea.vmem %s180, 4 [#allocation2]
        %v247 = vld [vmem:[%s246] sm:$0xf]
        %s248 = scalar_lea.vmem %s180, 16 [#allocation2]
        %v249 = vld [vmem:[%s248] sm:$0xf]
        %250 = vrot.lane.b32.xlu0 %v247, 64
        %v251 = vpop.permute.xlu0 %250
        %v252 = vsel %vm232, %v251, %v247
        %253 = vrot.lane.b32.xlu0 %v252, 64
        %v254 = vpop.permute.xlu0 %253
        %v255 = vsel %vm232, %v254, %v247
        %257 = vrot.lane.b32.xlu0 %v255, 65
        %v258 = vpop.permute.xlu0 %257
        %v260 = vsel %vm240, 0.0, %v258
        %s261 = scalar_lea.vmem %s180, 8 [#allocation2]
        %v262 = vld [vmem:[%s261] sm:$0xf]
        %s263 = scalar_lea.vmem %s180, 20 [#allocation2]
        %v264 = vld [vmem:[%s263] sm:$0xf]
        %265 = vrot.lane.b32.xlu0 %v262, 64
        %v266 = vpop.permute.xlu0 %265
        %v267 = vsel %vm232, %v266, %v262
        %268 = vrot.lane.b32.xlu0 %v267, 64
        %v269 = vpop.permute.xlu0 %268
        %v270 = vsel %vm232, %v269, %v262
        %272 = vrot.lane.b32.xlu0 %v270, 65
        %v273 = vpop.permute.xlu0 %272
        %v275 = vsel %vm240, 0.0, %v273
        %v277 = vrot.slane %v231, 4
        %v280 = vrot.slane %v260, 4
        %v283 = vrot.slane %v247, 4
        %v286 = vrot.slane %v264, 4
        %vm288 = vcmask 1043456
        %v289 = vsel %vm288, %v245, %v277
        %v290 = vsel %vm288, %v229, %v280
        %v291 = vsel %vm288, %v249, %v283
        %v292 = vsel %vm288, %v275, %v286
        %v293 = vld [vmem:[%s1] sm:$0xff]
        %v294 = vld [vmem:[%s1 + $0x8] sm:$0x1f]
        %v295 = vld [vmem:[%s2] sm:$0xff]
        %v296 = vld [vmem:[%s2 + $0x8] sm:$0x1f]
        %298 = vset.pattern.permute.xlu0 0
        %299 = vperm.xlu0 %298, %v295
        %v300 = vpop.permute.xlu0 %299
        %303 = vset.pattern.permute.xlu0 0
        %304 = vperm.xlu0 %303, %v296
        %v305 = vpop.permute.xlu0 %304
        %vm307 = vcmask 293888
        %v309 = vsel %vm307, %v293, 0
        %v312 = vsel %vm307, %v294, 0
        %v315 = vsel %vm288, %v262, 0
        %317 = vmatprep.subr.mxu0 0.0
        %318 = vmatpush1.msra.mxu0 0.0
        %319 = vmatprep.subr.mxu0 0.0
        %320 = vmatpush1.msra.mxu0 0.0
        %321 = vmatprep.subr.mxu0 0.0
        %322 = vmatpush1.msra.mxu0 0.0
        %323 = vmatprep.subr.mxu0 0.0
        %324 = vmatpush1.msra.mxu0 0.0
        %325 = vmatprep.subr.mxu0 0.0
        %326 = vmatpush1.msra.mxu0 0.0
        %327 = vmatprep.subr.mxu0 0.0
        %328 = vmatpush1.msra.mxu0 0.0
        %329 = vmatprep.subr.mxu0 0.0
        %330 = vmatpush1.msra.mxu0 0.0
        %331 = vmatprep.subr.mxu0 0.0
        %332 = vmatpush1.msra.mxu0 0.0
        %333 = vmatprep.subr.mxu0 0.0
        %334 = vmatpush1.msra.mxu0 0.0
        %335 = vmatprep.subr.mxu0 0.0
        %336 = vmatpush1.msra.mxu0 0.0
        %337 = vmatprep.subr.mxu0 0.0
        %338 = vmatpush1.msra.mxu0 0.0
        %339 = vmatprep.subr.mxu0 0.0
        %340 = vmatpush1.msra.mxu0 %v315
        %341 = vmatprep.subr.mxu0 0.0
        %342 = vmatpush1.msra.mxu0 %v292
        %343 = vmatprep.subr.mxu0 0.0
        %344 = vmatpush1.msra.mxu0 %v291
        %345 = vmatprep.subr.mxu0 0.0
        %346 = vmatpush1.msra.mxu0 %v290
        %347 = vmatprep.subr.mxu0 0.0
        %348 = vmatpush1.msra.mxu0 %v289
        %349 = vmatprep.subr.mxu0 0.0
        %350 = vmatpush2.msra.mxu0 0.0
        %351 = vmatprep.subr.mxu0 0.0
        %352 = vmatpush2.msra.mxu0 0.0
        %353 = vmatprep.subr.mxu0 0.0
        %354 = vmatpush2.msra.mxu0 0.0
        %355 = vmatprep.subr.mxu0 0.0
        %356 = vmatpush2.msra.mxu0 0.0
        %357 = vmatprep.subr.mxu0 0.0
        %358 = vmatpush2.msra.mxu0 0.0
        %359 = vmatprep.subr.mxu0 0.0
        %360 = vmatpush2.msra.mxu0 0.0
        %361 = vmatprep.subr.mxu0 0.0
        %362 = vmatpush2.msra.mxu0 0.0
        %363 = vmatprep.subr.mxu0 0.0
        %364 = vmatpush2.msra.mxu0 0.0
        %365 = vmatprep.subr.mxu0 0.0
        %366 = vmatpush2.msra.mxu0 0.0
        %367 = vmatprep.subr.mxu0 0.0
        %368 = vmatpush2.msra.mxu0 0.0
        %369 = vmatprep.subr.mxu0 0.0
        %370 = vmatpush2.msra.mxu0 0.0
        %371 = vmatprep.subr.mxu0 0.0
        %372 = vmatpush2.msra.mxu0 0.0
        %373 = vmatprep.subr.mxu0 0.0
        %374 = vmatpush2.msra.mxu0 0.0
        %375 = vmatprep.subr.mxu0 0.0
        %376 = vmatpush2.msra.mxu0 0.0
        %377 = vmatprep.subr.mxu0 0.0
        %378 = vmatpush2.msra.mxu0 0.0
        %379 = vmatprep.subr.mxu0 0.0
        %380 = vmatpush2.msra.mxu0 0.0
        %381 = vmatprep.mubr.f32.mxu0 0.0
        %382 = vmatmul.mubr.f32.gmra.mxu0 %v309
        %v383 = vpop.f32.mrf.mxu0
        %v384 = vadd.f32 %v300, %v383
        %v385 = vpop.f32.mrf.mxu0
        %386 = vmatprep.mubr.f32.mxu0 0.0
        %387 = vmatmul.mubr.f32.gmra.mxu0 %v312
        %v388 = vpop.f32.mrf.mxu0
        %v389 = vadd.f32 %v305, %v388
        %v390 = vpop.f32.mrf.mxu0
        %391 = vdwg.mxu0
        %v392 = vmax.f32 %v249, %v247
        %v393 = vmax.f32 %v264, %v262
        %v394 = vmax.f32 %v392, %v393
        %v395 = vmax.f32 %v384, 0.0
        %v396 = vmax.f32 %v389, 0.0
        %vm397 = vcmask 523264
        %398 = vst.msk [vmem:[%s213] sm:$0xff] %vm397, %v395
        %vm399 = vcmask 520192
        %400 = vst.msk [vmem:[%s213 + $0x8] sm:$0x1f] %vm399, %v396
        %v401 = vmax.f32 %v394, 0.0
        %vm402 = vcmask 519168
        %403 = vst.msk [vmem:[%s213 + $0xd] sm:$0xf] %vm402, %v401
        %p404 = scmp.lt.s32.totalorder %s21, 1
        %s405 = scalar_select %p404, %s21, 1
        %p406 = scmp.lt.s32.totalorder %s22, 0
        %s407 = scalar_select %p406, %s22, 0
        %s408 = smul.addr %s405, 3
        %s409 = sadd.s32 %s407, %s408
        %s410 = smul.addr %s409, 8
        %s411 = scalar_lea.vmem %s3, %s410
        // Predicated region
        $region37: #{tpu_custom_call.1} parent=31 // pred_check
          %p412 = pneg %p119
        $region38: #{tpu_custom_call.1} parent=31 // pred_check_branch
          %414 = sbr.rel (%p412) target = $region40
        $region39: #{tpu_custom_call.1} parent=31 // pred_region
          _
        $region40: #{tpu_custom_call.1} parent=31 // pred_fallthru
          _
      $region32: #{tpu_custom_call.1} parent=5 // pred_fallthru
        _
      %p415 = scmp.le.s32.totalorder 2, %s12
      // Predicated region
      $region41: #{tpu_custom_call.1} parent=5 // pred_check
        %p416 = pneg %p415
      $region42: #{tpu_custom_call.1} parent=5 // pred_check_branch
        %418 = sbr.rel (%p416) target = $region44
      $region43: #{tpu_custom_call.1} parent=5 // pred_region
        %s419 = ssub.s32 %s12, 2
        // Predicated region
        $region45: #{tpu_custom_call.1} parent=43 // pred_check
          %p420 = pneg %p125
        $region46: #{tpu_custom_call.1} parent=43 // pred_check_branch
          %422 = sbr.rel (%p420) target = $region48
        $region47: #{tpu_custom_call.1} parent=43 // pred_region
          %p423 = scmp.lt.s32.totalorder %s23, 1
          %s424 = scalar_select %p423, %s23, 1
          %p425 = scmp.lt.s32.totalorder %s24, 0
          %s426 = scalar_select %p425, %s24, 0
          %s427 = smul.addr %s424, 3
          %s428 = sadd.s32 %s426, %s427
          %s429 = smul.addr %s428, 8
          %s430 = scalar_lea.vmem %s3, %s429
        $region48: #{tpu_custom_call.1} parent=43 // pred_fallthru
          _
      $region44: #{tpu_custom_call.1} parent=5 // pred_fallthru
        _
    $region6: #{tpu_custom_call.1} parent=1 // loop_footer
      %s16 = sadd.s32 1, %s12
    $region7: #{tpu_custom_call.1} parent=1 // loop_footer_branch
      %11 = sbr.rel target = $region3
    $region8: #{tpu_custom_call.1} parent=1 // loop_exit
      _
    %431 = vsyncpa [#allocation3], 1
    %s432 = scalar_lea.sflag [#allocation3], 1
    %433 = vsyncpa %s432, 1

</llo_original>
